<compile_context>
chip_gen: v5e
topology: v5e:2x2
jax: 0.10.0
libtpu: 0.0.40
codegen_flags: <defaults>
</compile_context>

<pallas_src>
import functools

import jax
import jax.numpy as jnp
from jax.experimental import pallas as pl
from jax.experimental.pallas import tpu as pltpu


def _lsigmoid_kernel(slope_ref, x_ref, o_ref, *, half_beta):
    # slope_ref: (tF, 1); x_ref / o_ref: (tF, tT).
    # beta * sigmoid(z) == (0.5*beta) * tanh(0.5*z) + (0.5*beta)
    hs = 0.5 * slope_ref[...].astype(jnp.float32)          # (tF, 1), tiny column
    x = x_ref[...].astype(jnp.float32)                     # (tF, tT)
    y = half_beta * jnp.tanh(hs * x) + half_beta           # lane-broadcast of hs
    o_ref[...] = y.astype(o_ref.dtype)


# Tile caps: grow the lane dim (tT), keep tF <= 256 so the (tF,1) slope column
# stays a small fraction of the 64-vreg file while it is lane-broadcast.
_TF_CAP = 256    # sublane tile cap (multiple of 8)
_TT_CAP = 4096   # lane tile cap (multiple of 128)


def learnable_sigmoid_2d(x, slope, beta=1.0):
    """x: (B, F, T), slope: (F, 1). Returns beta * sigmoid(slope * x)."""
    B, F, T = x.shape
    assert slope.shape == (F, 1)

    # Collapse batch & feature into one sublane axis.
    BF = B * F
    x2 = x.reshape(BF, T)
    slope2 = jnp.broadcast_to(slope.reshape(1, F, 1), (B, F, 1)).reshape(BF, 1)

    # Fixed tiles + cdiv grid (Pallas masks the ragged edge block).
    # If the dim is smaller than the cap, use the full dim (always legal).
    tF = _TF_CAP if BF > _TF_CAP else BF
    tT = _TT_CAP if T > _TT_CAP else T
    grid = (pl.cdiv(BF, tF), pl.cdiv(T, tT))

    # TODO(synk): if beta ever becomes a traced/learnable scalar, pass it as a
    # (1, 1) SMEM input instead of baking it as a compile-time constant.
    kernel = functools.partial(_lsigmoid_kernel, half_beta=0.5 * float(beta))

    # Explicit VMEM budget: double-buffered (in + out) tiles + slope + headroom,
    # capped at 48 MiB (safe inside v7x's 64 MiB physical VMEM, and lifts the
    # 16 MiB v5e scoped default when tiles are large).
    tile_bytes = tF * tT * x.dtype.itemsize
    needed = 2 * 2 * tile_bytes + 2 * tF * slope.dtype.itemsize
    vmem_limit = min(48 << 20, max(needed + (8 << 20), 16 << 20))

    n = B * F * T
    cost = pl.CostEstimate(
        flops=3 * n,
        transcendentals=n,
        bytes_accessed=2 * n * x.dtype.itemsize + BF * slope.dtype.itemsize,
    )

    out2 = pl.pallas_call(
        kernel,
        out_shape=jax.ShapeDtypeStruct((BF, T), x.dtype),
        grid_spec=pltpu.PrefetchScalarGridSpec(
            num_scalar_prefetch=0,
            grid=grid,
            in_specs=[
                # slope column tracks only the BF tile; constant along T so it
                # is re-fetched only when the sublane tile changes (tiny DMA).
                pl.BlockSpec((tF, 1), lambda i, j: (i, 0)),
                pl.BlockSpec((tF, tT), lambda i, j: (i, j)),
            ],
            out_specs=pl.BlockSpec((tF, tT), lambda i, j: (i, j)),
        ),
        compiler_params=pltpu.CompilerParams(
            dimension_semantics=("parallel", "parallel"),
            vmem_limit_bytes=vmem_limit,
        ),
        cost_estimate=cost,
    )(slope2, x2)

    return out2.reshape(B, F, T)


if __name__ == "__main__":
    key = jax.random.PRNGKey(0)

    B, F, T = 2, 16, 256          # batch, in_features, time (lane-dense last dim)
    beta = 1.0

    kx, ks = jax.random.split(key)
    x = jax.random.normal(kx, (B, F, T), dtype=jnp.float32)

    # Parameter init matching nn.Parameter(torch.ones(in_features, 1)), plus a
    # small deterministic perturbation so the feature-axis broadcast is exercised.
    slope = jnp.ones((F, 1), dtype=jnp.float32) + 0.1 * jax.random.normal(
        ks, (F, 1), dtype=jnp.float32)

    out = learnable_sigmoid_2d(x, slope, beta=beta)
    out = jax.block_until_ready(out)

    # Reference in plain JAX (same math as the PyTorch forward).
    ref = beta * jax.nn.sigmoid(slope[None, :, :] * x)
    assert out.shape == x.shape
    assert jnp.allclose(out, ref, atol=1e-5, rtol=1e-5)

    print("KERNEL_OK")
</pallas_src>

<mosaic_0001>
module attributes {stable_mosaic.version = 11 : i64} {
  func.func @_lsigmoid_kernel(%arg0: i32, %arg1: i32, %arg2: memref<32x1xf32, #tpu.memory_space<vmem>>, %arg3: memref<32x256xf32, #tpu.memory_space<vmem>>, %arg4: memref<32x256xf32, #tpu.memory_space<vmem>>) attributes {dimension_semantics = [#tpu.dimension_semantics<parallel>, #tpu.dimension_semantics<parallel>], iteration_bounds = array<i64: 1, 1>, scalar_prefetch = 0 : i64, scratch_operands = 0 : i64, tpu.core_type = #tpu.core_type<tc>, window_params = [{transform_indices = @transform_0, window_bounds = array<i64: 32, 1>}, {transform_indices = @transform_1, window_bounds = array<i64: 32, 256>}, {transform_indices = @transform_2, window_bounds = array<i64: 32, 256>}]} {
    %c0 = arith.constant 0 : index
    %c0_0 = arith.constant 0 : index
    %0 = vector.load %arg2[%c0, %c0_0] : memref<32x1xf32, #tpu.memory_space<vmem>>, vector<32x1xf32>
    %cst = arith.constant 5.000000e-01 : f32
    %1 = vector.broadcast %cst : f32 to vector<32x1xf32>
    %2 = arith.mulf %1, %0 : vector<32x1xf32>
    %c0_1 = arith.constant 0 : index
    %c0_2 = arith.constant 0 : index
    %3 = vector.load %arg3[%c0_1, %c0_2] : memref<32x256xf32, #tpu.memory_space<vmem>>, vector<32x256xf32>
    %4 = vector.broadcast %2 : vector<32x1xf32> to vector<32x256xf32>
    %5 = arith.mulf %4, %3 : vector<32x256xf32>
    %6 = math.tanh %5 : vector<32x256xf32>
    %cst_3 = arith.constant 5.000000e-01 : f32
    %7 = vector.broadcast %cst_3 : f32 to vector<32x256xf32>
    %8 = arith.mulf %7, %6 : vector<32x256xf32>
    %cst_4 = arith.constant 5.000000e-01 : f32
    %9 = vector.broadcast %cst_4 : f32 to vector<32x256xf32>
    %10 = arith.addf %8, %9 : vector<32x256xf32>
    %c0_5 = arith.constant 0 : index
    %c0_6 = arith.constant 0 : index
    %11 = vector.load %arg4[%c0_5, %c0_6] : memref<32x256xf32, #tpu.memory_space<vmem>>, vector<32x256xf32>
    tpu.vector_store %arg4[%c0_5, %c0_6], %10 {strides = array<i32>} : memref<32x256xf32, #tpu.memory_space<vmem>>, vector<32x256xf32>,
    return
  }
  func.func @transform_0(%arg0: i32, %arg1: i32) -> (i32, i32) {
    %c0_i32 = arith.constant 0 : i32
    %c0_i32_0 = arith.constant 0 : i32
    return %arg0, %c0_i32 : i32, i32
  }
  func.func @transform_1(%arg0: i32, %arg1: i32) -> (i32, i32) {
    %c0_i32 = arith.constant 0 : i32
    return %arg0, %arg1 : i32, i32
  }
  func.func @transform_2(%arg0: i32, %arg1: i32) -> (i32, i32) {
    %c0_i32 = arith.constant 0 : i32
    return %arg0, %arg1 : i32, i32
  }
}

</mosaic_0001>

<llo_original>
// kernel: tpu_custom_call.1
$region0: #{tpu_custom_call.1}
  #allocation0 [shape = 'u32[]', space=smem, size = 0x4, offset = 0x4, fixed_abs, tag = 'smem constant byte address 0x4 - core index']
  #allocation1 [shape = 'u32[72,128]{1,0:T(1,128)}', space=vmem, size = 0x9000, scoped, tag = 'internal scratch']
  %s0 = inlined_call_operand.vmem [shape: f32[32,1], index: 0, kind: input, shape index: {}]
  %s1 = inlined_call_operand.hbm [shape: f32[32,256], index: 1, kind: input, shape index: {}]
  %s2 = inlined_call_operand.hbm [shape: f32[32,256], index: 2, kind: output, shape index: {}]
  %s3 = sld [smem:[#allocation0]]
  $region22: #{tpu_custom_call.1} parent=0
    _
  %s5 = ssub.s32 1, %s3
  %s6 = scalar_select 0, %s5, %s3
  $region1: #{tpu_custom_call.1} parent=0
    #allocation2 [shape = 'u8[32768]{0}', space=vmem, size = 0x8000, scoped, tag = 'input window, operand 1, single buffered']
    #allocation3 [shape = 's32[1]{0}', space=sflag, size = 0x4, scoped, tag = 'scoped memory for tpu_custom_call.1']
    #allocation4 [shape = 's32[1]{0}', space=sflag, size = 0x4, scoped, tag = 'scoped memory for tpu_custom_call.1']
    #allocation5 [shape = 'u8[32768]{0}', space=vmem, size = 0x8000, scoped, tag = 'output window, operand 0, single buffered']
    %7 = vsyncpa [#allocation3], 0
    %8 = vsyncpa [#allocation4], 0
    // Predicated region
    $region2: #{tpu_custom_call.1} parent=1 // pred_check
      _
    $region3: #{tpu_custom_call.1} parent=1 // pred_check_branch
      %10 = sbr.rel (0) target = $region5
    $region4: #{tpu_custom_call.1} parent=1 // pred_region
      _
    $region5: #{tpu_custom_call.1} parent=1 // pred_fallthru
      _
    // Predicated region
    $region6: #{tpu_custom_call.1} parent=1 // pred_check
      _
    $region7: #{tpu_custom_call.1} parent=1 // pred_check_branch
      %12 = sbr.rel (0) target = $region9
    $region8: #{tpu_custom_call.1} parent=1 // pred_region
      %14 = vsyncadd [#allocation3], 0
      %s15 = sshll.u32 %s1, 4
      %s16 = int_to_ptr.hbm [resolvable:$true] %s15
      %s17 = sshll.u32 [#allocation2], 4
      %s18 = int_to_ptr.vmem [resolvable:$true] %s17
      %23 = dma.hbm_to_vmem [thread:$0]  %s16, 1024, %s18, [#allocation3], 256, 256, 16
    $region9: #{tpu_custom_call.1} parent=1 // pred_fallthru
      _
    // Predicated region
    $region10: #{tpu_custom_call.1} parent=1 // pred_check
      _
    $region11: #{tpu_custom_call.1} parent=1 // pred_check_branch
      %25 = sbr.rel (0) target = $region13
    $region12: #{tpu_custom_call.1} parent=1 // pred_region
      %27 = dma.done [#allocation3], 1024
    $region13: #{tpu_custom_call.1} parent=1 // pred_fallthru
      _
    %v28 = vld [vmem:[%s0] sm:$0xff]
    %v29 = vld [vmem:[%s0 + $0x8] sm:$0xff]
    %v30 = vld [vmem:[%s0 + $0x10] sm:$0xff]
    %v31 = vld [vmem:[%s0 + $0x18] sm:$0xff]
    %v32 = vmul.f32 %v28, 0.5
    %v33 = vmul.f32 %v29, 0.5
    %v34 = vmul.f32 %v30, 0.5
    %v35 = vmul.f32 %v31, 0.5
    %v36 = vld [vmem:[#allocation2] sm:$0xff]
    %v37 = vld [vmem:[#allocation2 + $0x8] sm:$0xff]
    %v38 = vld [vmem:[#allocation2 + $0x10] sm:$0xff]
    %v39 = vld [vmem:[#allocation2 + $0x18] sm:$0xff]
    %v40 = vld [vmem:[#allocation2 + $0x20] sm:$0xff]
    %v41 = vld [vmem:[#allocation2 + $0x28] sm:$0xff]
    %v42 = vld [vmem:[#allocation2 + $0x30] sm:$0xff]
    %v43 = vld [vmem:[#allocation2 + $0x38] sm:$0xff]
    %45 = vset.pattern.permute.xlu0 0
    %46 = vperm.xlu0 %45, %v32
    %v47 = vpop.permute.xlu0 %46
    %50 = vset.pattern.permute.xlu0 0
    %51 = vperm.xlu0 %50, %v33
    %v52 = vpop.permute.xlu0 %51
    %55 = vset.pattern.permute.xlu0 0
    %56 = vperm.xlu0 %55, %v34
    %v57 = vpop.permute.xlu0 %56
    %60 = vset.pattern.permute.xlu0 0
    %61 = vperm.xlu0 %60, %v35
    %v62 = vpop.permute.xlu0 %61
    %v64 = vmul.f32 %v47, %v36
    %v65 = vmul.f32 %v47, %v37
    %v66 = vmul.f32 %v52, %v38
    %v67 = vmul.f32 %v52, %v39
    %v68 = vmul.f32 %v57, %v40
    %v69 = vmul.f32 %v57, %v41
    %v70 = vmul.f32 %v62, %v42
    %v71 = vmul.f32 %v62, %v43
    %v72 = vtanh.pop %v64
    %v73 = vtanh.pop %v65
    %v74 = vtanh.pop %v66
    %v75 = vtanh.pop %v67
    %v76 = vtanh.pop %v68
    %v77 = vtanh.pop %v69
    %v78 = vtanh.pop %v70
    %v79 = vtanh.pop %v71
    %v80 = vmul.f32 %v72, 0.5
    %v81 = vmul.f32 %v73, 0.5
    %v82 = vmul.f32 %v74, 0.5
    %v83 = vmul.f32 %v75, 0.5
    %v84 = vmul.f32 %v76, 0.5
    %v85 = vmul.f32 %v77, 0.5
    %v86 = vmul.f32 %v78, 0.5
    %v87 = vmul.f32 %v79, 0.5
    %v88 = vadd.f32 %v80, 0.5
    %v89 = vadd.f32 %v81, 0.5
    %v90 = vadd.f32 %v82, 0.5
    %v91 = vadd.f32 %v83, 0.5
    %v92 = vadd.f32 %v84, 0.5
    %v93 = vadd.f32 %v85, 0.5
    %v94 = vadd.f32 %v86, 0.5
    %v95 = vadd.f32 %v87, 0.5
    %96 = vst [vmem:[#allocation5] sm:$0xff] %v88
    %97 = vst [vmem:[#allocation5 + $0x8] sm:$0xff] %v89
    %98 = vst [vmem:[#allocation5 + $0x10] sm:$0xff] %v90
    %99 = vst [vmem:[#allocation5 + $0x18] sm:$0xff] %v91
    %100 = vst [vmem:[#allocation5 + $0x20] sm:$0xff] %v92
    %101 = vst [vmem:[#allocation5 + $0x28] sm:$0xff] %v93
    %102 = vst [vmem:[#allocation5 + $0x30] sm:$0xff] %v94
    %103 = vst [vmem:[#allocation5 + $0x38] sm:$0xff] %v95
    // Predicated region
    $region14: #{tpu_custom_call.1} parent=1 // pred_check
      _
    $region15: #{tpu_custom_call.1} parent=1 // pred_check_branch
      %105 = sbr.rel (0) target = $region17
    $region16: #{tpu_custom_call.1} parent=1 // pred_region
      %107 = vsyncadd [#allocation4], 0
      %s108 = sshll.u32 [#allocation5], 4
      %s109 = int_to_ptr.vmem [resolvable:$true] %s108
      %s110 = sshll.u32 %s2, 4
      %s111 = int_to_ptr.hbm [resolvable:$true] %s110
      %116 = dma.vmem_to_hbm [thread:$0]  %s109, 1024, %s111, [#allocation4], 256, 256, 16
    $region17: #{tpu_custom_call.1} parent=1 // pred_fallthru
      _
    // Predicated region
    $region18: #{tpu_custom_call.1} parent=1 // pred_check
      _
    $region19: #{tpu_custom_call.1} parent=1 // pred_check_branch
      %118 = sbr.rel (0) target = $region21
    $region20: #{tpu_custom_call.1} parent=1 // pred_region
      %120 = dma.done [#allocation4], 1024
    $region21: #{tpu_custom_call.1} parent=1 // pred_fallthru
      _
    %121 = vsyncpa [#allocation3], 1
    %122 = vsyncpa [#allocation4], 1

</llo_original>
